<compile_context>
chip_gen: v5e
topology: v5e:2x2
jax: 0.10.0
libtpu: 0.0.40
codegen_flags: <defaults>
</compile_context>

<pallas_src>
import functools
import math

import jax
import jax.numpy as jnp
import numpy as np
from jax.experimental import pallas as pl
from jax.experimental.pallas import tpu as pltpu


def _pe_add_kernel(x_ref, freq_ref, c_ref, o_ref, *, seq_fold):
    # x_ref   : (TR, TL) lane-dense slab of x; row r of grid step i covers
    #                    sequence positions [(i*TR + r)*seq_fold, ... + seq_fold)
    # freq_ref: (1, TL)  per-lane angular frequency  div_term[(lane % D) // 2]
    # c_ref   : (1, TL)  per-lane constant soff*freq + phase  (phase = 0 / pi/2)
    # o_ref   : (TR, TL) x + PE
    i = pl.program_id(0)
    tr = x_ref.shape[0]
    row = jax.lax.broadcasted_iota(jnp.int32, (tr, 1), 0)
    s_base = ((row + i * tr) * seq_fold).astype(jnp.float32)        # (TR, 1)
    angle = s_base * freq_ref[...] + c_ref[...]                     # (TR, TL)
    pe = jnp.sin(angle)                                             # sin only
    o_ref[...] = (x_ref[...].astype(jnp.float32) + pe).astype(o_ref.dtype)


def _choose_seq_fold(S, BD):
    """Pick a divisor k of S so L = k*BD is lane-dense (>=128), preferring
    L % 128 == 0 and the smallest such k (more grid rows)."""
    best = None
    for k in range(1, S + 1):
        if S % k != 0:
            continue
        L = k * BD
        score = (L >= 128, L % 128 == 0, -k)
        if best is None or score > best[0]:
            best = (score, k)
    return best[1]


def positional_encoding_forward(x, *, max_len=5000,
                                block_byte_budget=2 * 1024 * 1024):
    """x: (seq, batch, d_model) -> x + PE[:seq] (eval-mode forward)."""
    S, B, D = x.shape
    assert S <= max_len, "sequence longer than the positional-encoding table"
    BD = B * D
    itemsize = x.dtype.itemsize

    # Fold `seq_fold` consecutive sequence positions into the lane axis so the
    # kernel minor dim is lane-dense (>= 128, ideally a multiple of 128).
    seq_fold = _choose_seq_fold(S, BD)
    L = seq_fold * BD
    R = S // seq_fold
    x2d = x.reshape(R, L)                      # free row-major reshape

    # Tiny per-lane PE constants (computed once on host; negligible HBM).
    lane = np.arange(L)
    d = lane % D
    soff = (lane // BD).astype(np.float64)
    freq = np.exp((d // 2).astype(np.float64) * (-2.0 * math.log(10000.0) / D))
    phase = np.where(d % 2 == 0, 0.0, 0.5 * np.pi)  # even -> sin, odd -> cos
    cst = soff * freq + phase
    freq_j = jnp.asarray(freq.reshape(1, L), jnp.float32)
    cst_j = jnp.asarray(cst.reshape(1, L), jnp.float32)

    # Tile selection: blocks bounded by ~block_byte_budget.  Split the lane
    # axis (multiples of 128) when a single folded row is too big, otherwise
    # tile rows (multiples of 8).
    if L * itemsize * 8 <= block_byte_budget:
        TL = L
    else:
        TL = max(128, (block_byte_budget // (8 * itemsize)) // 128 * 128)
    TR = max(8, (block_byte_budget // (TL * itemsize)) // 8 * 8)
    if TR >= R:
        TR = R

    # Guarantee >=2 grid steps when there is enough data (v7x: 2 TensorCores;
    # also enables DMA/compute overlap).  Tiny inputs keep a single step.
    if pl.cdiv(R, TR) * pl.cdiv(L, TL) < 2 and R > 8:
        TR = ((pl.cdiv(R, 2) + 7) // 8) * 8    # < R for R > 8, multiple of 8

    grid = (pl.cdiv(R, TR), pl.cdiv(L, TL))
    block_bytes = TR * TL * itemsize
    vmem_limit_bytes = int(min(48 * 1024 * 1024,
                               max(16 * 1024 * 1024, 5 * block_bytes)))

    n_elem = S * B * D
    cost = pl.CostEstimate(
        flops=3 * n_elem,                       # angle mul+add, final add
        transcendentals=n_elem,                 # one sin per element
        bytes_accessed=2 * n_elem * itemsize + 2 * L * 4,
    )

    kernel = functools.partial(_pe_add_kernel, seq_fold=seq_fold)
    out = pl.pallas_call(
        kernel,
        out_shape=jax.ShapeDtypeStruct((R, L), x.dtype),
        grid_spec=pltpu.PrefetchScalarGridSpec(
            num_scalar_prefetch=0,
            grid=grid,
            in_specs=[
                pl.BlockSpec((TR, TL), lambda i, j: (i, j)),
                pl.BlockSpec((1, TL), lambda i, j: (0, j)),
                pl.BlockSpec((1, TL), lambda i, j: (0, j)),
            ],
            out_specs=pl.BlockSpec((TR, TL), lambda i, j: (i, j)),
        ),
        compiler_params=pltpu.CompilerParams(
            dimension_semantics=("parallel", "parallel"),
            vmem_limit_bytes=vmem_limit_bytes),
        cost_estimate=cost,
    )(x2d, freq_j, cst_j)
    # TODO(synk): nn.Dropout(p=0.1) in training mode is omitted; this is the
    # inference (model.eval()) path where dropout is the identity.
    return out.reshape(S, B, D)


def positional_encoding_reference(x, max_len=5000):
    """Pure-JAX/numpy reference matching the PyTorch buffer construction."""
    S, B, D = x.shape
    position = np.arange(0, max_len, dtype=np.float32)[:, None]
    div_term = np.exp(np.arange(0, D, 2, dtype=np.float32)
                      * (-math.log(10000.0) / D))
    pe = np.zeros((max_len, D), np.float32)
    pe[:, 0::2] = np.sin(position * div_term)
    pe[:, 1::2] = np.cos(position * div_term)
    pe = pe[:S, None, :]                       # (S, 1, D), broadcast over batch
    return x + jnp.asarray(pe)


if __name__ == "__main__":
    seq, batch, d_model = 8, 2, 32

    key = jax.random.PRNGKey(0)
    x = jax.random.normal(key, (seq, batch, d_model), jnp.float32)

    out = positional_encoding_forward(x)
    out = jax.block_until_ready(out)

    ref = positional_encoding_reference(x)
    assert out.shape == (seq, batch, d_model)
    assert jnp.allclose(out, ref, atol=1e-4, rtol=1e-4), "mismatch vs reference"

    print("KERNEL_OK")
</pallas_src>

<mosaic_0001>
module attributes {stable_mosaic.version = 11 : i64} {
  func.func @_pe_add_kernel(%arg0: i32, %arg1: i32, %arg2: memref<4x128xf32, #tpu.memory_space<vmem>>, %arg3: memref<1x128xf32, #tpu.memory_space<vmem>>, %arg4: memref<1x128xf32, #tpu.memory_space<vmem>>, %arg5: memref<4x128xf32, #tpu.memory_space<vmem>>) attributes {dimension_semantics = [#tpu.dimension_semantics<parallel>, #tpu.dimension_semantics<parallel>], iteration_bounds = array<i64: 1, 1>, scalar_prefetch = 0 : i64, scratch_operands = 0 : i64, tpu.core_type = #tpu.core_type<tc>, window_params = [{transform_indices = @transform_0, window_bounds = array<i64: 4, 128>}, {transform_indices = @transform_1, window_bounds = array<i64: 1, 128>}, {transform_indices = @transform_2, window_bounds = array<i64: 1, 128>}, {transform_indices = @transform_3, window_bounds = array<i64: 4, 128>}]} {
    %0 = tpu.iota {dimensions = array<i32: 0>} : vector<4x1xi32>
    %c4_i32 = arith.constant 4 : i32
    %1 = arith.muli %arg0, %c4_i32 : i32
    %2 = vector.broadcast %1 : i32 to vector<4x1xi32>
    %3 = arith.addi %0, %2 : vector<4x1xi32>
    %c2_i32 = arith.constant 2 : i32
    %4 = vector.broadcast %c2_i32 : i32 to vector<4x1xi32>
    %5 = arith.muli %3, %4 : vector<4x1xi32>
    %6 = arith.sitofp %5 : vector<4x1xi32> to vector<4x1xf32>
    %c0 = arith.constant 0 : index
    %c0_0 = arith.constant 0 : index
    %7 = vector.load %arg3[%c0, %c0_0] : memref<1x128xf32, #tpu.memory_space<vmem>>, vector<1x128xf32>
    %8 = vector.broadcast %6 : vector<4x1xf32> to vector<4x128xf32>
    %9 = vector.broadcast %7 : vector<1x128xf32> to vector<4x128xf32>
    %10 = arith.mulf %8, %9 : vector<4x128xf32>
    %c0_1 = arith.constant 0 : index
    %c0_2 = arith.constant 0 : index
    %11 = vector.load %arg4[%c0_1, %c0_2] : memref<1x128xf32, #tpu.memory_space<vmem>>, vector<1x128xf32>
    %12 = vector.broadcast %11 : vector<1x128xf32> to vector<4x128xf32>
    %13 = arith.addf %10, %12 : vector<4x128xf32>
    %14 = math.sin %13 : vector<4x128xf32>
    %c0_3 = arith.constant 0 : index
    %c0_4 = arith.constant 0 : index
    %15 = vector.load %arg2[%c0_3, %c0_4] : memref<4x128xf32, #tpu.memory_space<vmem>>, vector<4x128xf32>
    %16 = arith.addf %15, %14 : vector<4x128xf32>
    %c0_5 = arith.constant 0 : index
    %c0_6 = arith.constant 0 : index
    %17 = vector.load %arg5[%c0_5, %c0_6] : memref<4x128xf32, #tpu.memory_space<vmem>>, vector<4x128xf32>
    tpu.vector_store %arg5[%c0_5, %c0_6], %16 {strides = array<i32>} : memref<4x128xf32, #tpu.memory_space<vmem>>, vector<4x128xf32>,
    return
  }
  func.func @transform_0(%arg0: i32, %arg1: i32) -> (i32, i32) {
    %c0_i32 = arith.constant 0 : i32
    return %arg0, %arg1 : i32, i32
  }
  func.func @transform_1(%arg0: i32, %arg1: i32) -> (i32, i32) {
    %c0_i32 = arith.constant 0 : i32
    %c0_i32_0 = arith.constant 0 : i32
    return %c0_i32, %arg1 : i32, i32
  }
  func.func @transform_2(%arg0: i32, %arg1: i32) -> (i32, i32) {
    %c0_i32 = arith.constant 0 : i32
    %c0_i32_0 = arith.constant 0 : i32
    return %c0_i32, %arg1 : i32, i32
  }
  func.func @transform_3(%arg0: i32, %arg1: i32) -> (i32, i32) {
    %c0_i32 = arith.constant 0 : i32
    return %arg0, %arg1 : i32, i32
  }
}

</mosaic_0001>

<llo_original>
// kernel: tpu_custom_call.1
$region0: #{tpu_custom_call.1}
  #allocation0 [shape = 'u32[]', space=smem, size = 0x4, offset = 0x4, fixed_abs, tag = 'smem constant byte address 0x4 - core index']
  #allocation1 [shape = 'u32[72,128]{1,0:T(1,128)}', space=vmem, size = 0x9000, scoped, tag = 'internal scratch']
  %s0 = inlined_call_operand.hbm [shape: f32[4,128], index: 0, kind: input, shape index: {}]
  %s1 = inlined_call_operand.hbm [shape: f32[1,128], index: 1, kind: input, shape index: {}]
  %s2 = inlined_call_operand.vmem [shape: f32[1,128], index: 2, kind: input, shape index: {}]
  %s3 = inlined_call_operand.hbm [shape: f32[4,128], index: 3, kind: output, shape index: {}]
  %s4 = sld [smem:[#allocation0]]
  $region30: #{tpu_custom_call.1} parent=0
    _
  %s6 = ssub.s32 1, %s4
  %s7 = scalar_select 0, %s6, %s4
  $region1: #{tpu_custom_call.1} parent=0
    #allocation2 [shape = 'u8[2048]{0}', space=vmem, size = 0x800, scoped, tag = 'input window, operand 0, single buffered']
    #allocation3 [shape = 's32[1]{0}', space=sflag, size = 0x4, scoped, tag = 'scoped memory for tpu_custom_call.1']
    #allocation4 [shape = 's32[1]{0}', space=sflag, size = 0x4, scoped, tag = 'scoped memory for tpu_custom_call.1']
    #allocation5 [shape = 'u8[512]{0}', space=vmem, size = 0x400, scoped, tag = 'input window, operand 1, single buffered']
    #allocation6 [shape = 's32[1]{0}', space=sflag, size = 0x4, scoped, tag = 'scoped memory for tpu_custom_call.1']
    #allocation7 [shape = 'u8[2048]{0}', space=vmem, size = 0x800, scoped, tag = 'output window, operand 0, single buffered']
    %8 = vsyncpa [#allocation3], 0
    %9 = vsyncpa [#allocation6], 0
    %10 = vsyncpa [#allocation4], 0
    // Predicated region
    $region2: #{tpu_custom_call.1} parent=1 // pred_check
      _
    $region3: #{tpu_custom_call.1} parent=1 // pred_check_branch
      %12 = sbr.rel (0) target = $region5
    $region4: #{tpu_custom_call.1} parent=1 // pred_region
      %14 = vsyncadd [#allocation3], 0
      %s16 = sshll.u32 %s0, 4
      %s17 = int_to_ptr.hbm [resolvable:$true] %s16
      %s18 = sshll.u32 [#allocation2], 4
      %s19 = int_to_ptr.vmem [resolvable:$true] %s18
      %21 = dma.hbm_to_vmem [thread:$0]  %s17, 64, %s19, [#allocation3]
    $region5: #{tpu_custom_call.1} parent=1 // pred_fallthru
      _
    // Predicated region
    $region6: #{tpu_custom_call.1} parent=1 // pred_check
      _
    $region7: #{tpu_custom_call.1} parent=1 // pred_check_branch
      %23 = sbr.rel (0) target = $region9
    $region8: #{tpu_custom_call.1} parent=1 // pred_region
      %25 = vsyncadd [#allocation6], 0
      %s27 = sshll.u32 %s1, 4
      %s28 = int_to_ptr.hbm [resolvable:$true] %s27
      %s29 = sshll.u32 [#allocation5], 4
      %s30 = int_to_ptr.vmem [resolvable:$true] %s29
      %32 = dma.hbm_to_vmem [thread:$0]  %s28, 16, %s30, [#allocation6]
    $region9: #{tpu_custom_call.1} parent=1 // pred_fallthru
      _
    // Predicated region
    $region10: #{tpu_custom_call.1} parent=1 // pred_check
      _
    $region11: #{tpu_custom_call.1} parent=1 // pred_check_branch
      %34 = sbr.rel (0) target = $region13
    $region12: #{tpu_custom_call.1} parent=1 // pred_region
      _
    $region13: #{tpu_custom_call.1} parent=1 // pred_fallthru
      _
    // Predicated region
    $region14: #{tpu_custom_call.1} parent=1 // pred_check
      _
    $region15: #{tpu_custom_call.1} parent=1 // pred_check_branch
      %36 = sbr.rel (0) target = $region17
    $region16: #{tpu_custom_call.1} parent=1 // pred_region
      %38 = dma.done [#allocation3], 64
    $region17: #{tpu_custom_call.1} parent=1 // pred_fallthru
      _
    // Predicated region
    $region18: #{tpu_custom_call.1} parent=1 // pred_check
      _
    $region19: #{tpu_custom_call.1} parent=1 // pred_check_branch
      %40 = sbr.rel (0) target = $region21
    $region20: #{tpu_custom_call.1} parent=1 // pred_region
      %42 = dma.done [#allocation6], 16
    $region21: #{tpu_custom_call.1} parent=1 // pred_fallthru
      _
    %v43 = vlaneseq
    %v44 = vshrl.u32 %v43, 7
    %s45 = smul.u32 0, 4
    %v46 = vstv %s45
    %v47 = vadd.s32 %v44, %v46
    %v48 = vmul.u32 %v47, 2
    %v49 = vcvt.s32.f32 %v48
    %v50 = vld [vmem:[#allocation5] sm:$0x1]
    %v52 = vperm.slane %v50, 0
    %v54 = vmul.f32 %v49, %v52
    %v55 = vld [vmem:[%s2] sm:$0x1]
    %v57 = vperm.slane %v55, 0
    %v59 = vadd.f32 %v54, %v57
    %v60 = vand.u32 2147483647, %v59
    %vm61 = vcmp.le.f32.partialorder %v60, 0.7853982
    %vm62 = vcmp.lt.s32.totalorder %v59, 0
    %v63 = vand.u32 %v59, 2139095040
    %v64 = vshrl.u32 %v63, 23
    %v65 = vsub.s32 %v64, 127
    %v66 = vand.u32 2147483647, %v59
    %v67 = vand.u32 %v66, 8388607
    %v68 = vor.u32 %v67, 8388608
    %v69 = vsub.s32 0, %v68
    %v70 = vadd.s32 %v65, 1
    %vm71 = vcmp.gt.s32.totalorder %v70, 0
    %v72 = vsel %vm71, %v70, 0
    %v73 = vshrl.u32 %v72, 5
    %v74 = vand.u32 %v72, 31
    %v75 = vsub.s32 32, %v74
    %v76 = vshrl.u32 683565275, %v75
    %v77 = vshll.u32 683565275, %v74
    %v78 = vshrl.u32 2475754826, %v75
    %v79 = vor.u32 %v77, %v78
    %v80 = vshll.u32 2475754826, %v74
    %v81 = vshrl.u32 2131351028, %v75
    %v82 = vor.u32 %v80, %v81
    %v83 = vshll.u32 2131351028, %v74
    %v84 = vshrl.u32 2102212464, %v75
    %v85 = vor.u32 %v83, %v84
    %v86 = vshll.u32 2102212464, %v74
    %v87 = vshrl.u32 920167782, %v75
    %v88 = vor.u32 %v86, %v87
    %v89 = vshll.u32 920167782, %v74
    %v90 = vshrl.u32 1326507024, %v75
    %v91 = vor.u32 %v89, %v90
    %vm92 = vcmp.lt.s32.totalorder %v73, 1
    %vm93 = vcmp.lt.s32.totalorder %v73, 2
    %vm94 = vcmp.lt.s32.totalorder %v73, 3
    %vm95 = vcmp.lt.s32.totalorder %v73, 4
    %v96 = vsel %vm92, %v76, %v79
    %v97 = vsel %vm95, %v85, 2102212464
    %v98 = vsel %vm94, %v82, %v97
    %v99 = vsel %vm93, %v96, %v98
    %v100 = vsel %vm92, %v79, %v82
    %v101 = vsel %vm95, %v88, 920167782
    %v102 = vsel %vm94, %v85, %v101
    %v103 = vsel %vm93, %v100, %v102
    %v104 = vsel %vm92, %v82, %v85
    %v105 = vsel %vm95, %v91, 1326507024
    %v106 = vsel %vm94, %v88, %v105
    %v107 = vsel %vm93, %v104, %v106
    %v108 = vshll.u32 %v68, 8
    %v109 = vand.u32 %v108, 65535
    %v110 = vshrl.u32 %v108, 16
    %v111 = vand.u32 %v107, 65535
    %v112 = vshrl.u32 %v107, 16
    %v113 = vmul.u32 %v109, %v111
    %v114 = vmul.u32 %v109, %v112
    %v115 = vmul.u32 %v110, %v111
    %v116 = vmul.u32 %v110, %v112
    %v117 = vshll.u32 %v114, 16
    %v118 = vshrl.u32 %v114, 16
    %v119 = vshll.u32 %v115, 16
    %v120 = vshrl.u32 %v115, 16
    %vm121 = vc.u32 %v113, %v117
    %v122 = vsel %vm121, 1, 0
    %v123 = vadd.s32 %v113, %v117
    %v124 = vadd.s32 %v116, %v122
    %vm125 = vc.u32 %v123, %v119
    %v126 = vsel %vm125, 1, 0
    %v127 = vadd.s32 %v123, %v119
    %v128 = vadd.s32 %v124, %v126
    %v129 = vadd.s32 %v128, %v118
    %v130 = vadd.s32 %v129, %v120
    %v131 = vand.u32 %v108, 65535
    %v132 = vshrl.u32 %v108, 16
    %v133 = vand.u32 %v103, 65535
    %v134 = vshrl.u32 %v103, 16
    %v135 = vmul.u32 %v131, %v133
    %v136 = vmul.u32 %v131, %v134
    %v137 = vmul.u32 %v132, %v133
    %v138 = vmul.u32 %v132, %v134
    %v139 = vshll.u32 %v136, 16
    %v140 = vshrl.u32 %v136, 16
    %v141 = vshll.u32 %v137, 16
    %v142 = vshrl.u32 %v137, 16
    %vm143 = vc.u32 %v135, %v139
    %v144 = vsel %vm143, 1, 0
    %v145 = vadd.s32 %v135, %v139
    %v146 = vadd.s32 %v138, %v144
    %vm147 = vc.u32 %v145, %v141
    %v148 = vsel %vm147, 1, 0
    %v149 = vadd.s32 %v145, %v141
    %v150 = vadd.s32 %v146, %v148
    %v151 = vadd.s32 %v150, %v140
    %v152 = vadd.s32 %v151, %v142
    %v153 = vmul.u32 %v108, %v99
    %v154 = vadd.s32 %v130, %v149
    %vm155 = vc.u32 %v130, %v149
    %v156 = vadd.s32 %v152, 1
    %v157 = vsel %vm155, %v156, %v152
    %v158 = vadd.s32 %v153, %v157
    %v159 = vadd.s32 %v158, 536870912
    %v160 = vshrl.u32 %v159, 30
    %v161 = vshll.u32 %v160, 30
    %v162 = vsub.s32 %v158, %v161
    %vm163 = vcmp.lt.s32.totalorder %v162, 0
    %v164 = vsub.s32 0, %v162
    %v165 = vsel %vm163, %v164, %v162
    %v166 = vclz %v165
    %v167 = vsub.s32 %v166, 2
    %vm168 = vcmp.gt.s32.totalorder 0, %v167
    %v169 = vsel %vm168, 0, %v167
    %v170 = vsub.s32 32, %v169
    %v171 = vshll.u32 %v162, %v169
    %v172 = vshrl.u32 %v154, %v170
    %v173 = vor.u32 %v171, %v172
    %v174 = vsub.s32 4294967266, %v169
    %v175 = vadd.s32 %v174, 127
    %v176 = vshll.u32 %v175, 23
    %v177 = vor.u32 4788187, %v176
    %v178 = vand.u32 2147483647, %v177
    %v180 = vcvt.s32.f32 %v173
    %v181 = vmul.f32 %v180, %v178
    %v182 = vxor.u32 %v181, 2147483648
    %v183 = vsel %vm62, %v182, %v181
    %v184 = vsub.s32 4, %v160
    %v185 = vsel %vm62, %v184, %v160
    %v186 = vsel %vm61, %v59, %v183
    %v187 = vsel %vm61, 0, %v185
    %v188 = vmul.f32 %v186, %v186
    %v189 = vmul.f32 %v188, -0.001358992
    %v190 = vadd.f32 %v189, 0.041655596
    %v191 = vmul.f32 %v188, %v190
    %v192 = vadd.f32 %v191, -0.4999988
    %v193 = vmul.f32 %v188, %v192
    %v194 = vadd.f32 1.0, %v193
    %v195 = vmul.f32 %v186, %v186
    %v196 = vmul.f32 %v195, -0.00019511016
    %v197 = vadd.f32 %v196, 0.008332121
    %v198 = vmul.f32 %v195, %v197
    %v199 = vadd.f32 %v198, -0.16666654
    %v200 = vmul.f32 %v195, %v199
    %v201 = vadd.f32 %v200, 1.0
    %v202 = vmul.f32 %v201, %v186
    %vm203 = vweird.f32 %v59
    %v204 = vadd.s32 %v187, 3
    %v205 = vand.u32 %v204, 3
    %vm206 = vcmp.lt.s32.totalorder %v205, 2
    %vm207 = vcmp.eq.s32.totalorder %v205, 0
    %v208 = vxor.u32 %v202, 2147483648
    %v209 = vsel %vm207, %v194, %v208
    %vm210 = vcmp.eq.s32.totalorder %v205, 2
    %v211 = vxor.u32 %v194, 2147483648
    %v212 = vsel %vm210, %v211, %v202
    %v213 = vsel %vm206, %v209, %v212
    %v214 = vsel %vm203, nan, %v213
    %v215 = vld [vmem:[#allocation2] sm:$0xf]
    %v216 = vadd.f32 %v215, %v214
    %217 = vst [vmem:[#allocation7] sm:$0xf] %v216
    // Predicated region
    $region22: #{tpu_custom_call.1} parent=1 // pred_check
      _
    $region23: #{tpu_custom_call.1} parent=1 // pred_check_branch
      %219 = sbr.rel (0) target = $region25
    $region24: #{tpu_custom_call.1} parent=1 // pred_region
      %221 = vsyncadd [#allocation4], 0
      %s223 = sshll.u32 [#allocation7], 4
      %s224 = int_to_ptr.vmem [resolvable:$true] %s223
      %s225 = sshll.u32 %s3, 4
      %s226 = int_to_ptr.hbm [resolvable:$true] %s225
      %228 = dma.vmem_to_hbm [thread:$0]  %s224, 64, %s226, [#allocation4]
    $region25: #{tpu_custom_call.1} parent=1 // pred_fallthru
      _
    // Predicated region
    $region26: #{tpu_custom_call.1} parent=1 // pred_check
      _
    $region27: #{tpu_custom_call.1} parent=1 // pred_check_branch
      %230 = sbr.rel (0) target = $region29
    $region28: #{tpu_custom_call.1} parent=1 // pred_region
      %232 = dma.done [#allocation4], 64
    $region29: #{tpu_custom_call.1} parent=1 // pred_fallthru
      _
    %233 = vsyncpa [#allocation3], 1
    %234 = vsyncpa [#allocation6], 1
    %235 = vsyncpa [#allocation4], 1

</llo_original>
